<compile_context>
chip_gen: v7x
topology: tpu7x:2x2x1
jax: 0.10.0
libtpu: 0.0.40
codegen_flags: <defaults>
</compile_context>

<pallas_src>
import jax
import jax.numpy as jnp
from jax.experimental import pallas as pl
from jax.experimental.pallas import tpu as pltpu

IN_F = 4
OUT_F = 4

# Packed-parameter layout inside the single (16, 128) f32 buffer P
# (every slice lane-0 aligned):
#   P[0:4,  0:4] = W0  (in, out)   fc_0 weight transposed vs torch's (out, in)
#   P[4,    0:4] = b0
#   P[5:9,  0:4] = W7  (in, out)
#   P[9,    0:4] = b7
#   P[10:14,0:4] = W8  (in, out)
#   P[14,   0:4] = b8
P_ROWS, P_LANES = 16, 128
_R7, _R8 = 5, 10


def _mlp_kernel(x_ref, p_ref, o_ref):
    x = x_ref[...]                                    # (TB, 4) lane-major rows

    # ---- Stage 1: v1 = relu(x @ W0 + b0), unrolled over the 4 input features.
    acc1 = p_ref[IN_F:IN_F + 1, 0:OUT_F]              # b0, (1, 4)
    for k in range(IN_F):
        acc1 = acc1 + x[:, k:k + 1] * p_ref[k:k + 1, 0:OUT_F]
    v1 = jnp.maximum(acc1, 0.0)                       # (TB, 4)

    # ---- Stage 2: both heads share the v1[:, k] lane-broadcast per step.
    acc4 = p_ref[_R7 + IN_F:_R7 + IN_F + 1, 0:OUT_F]  # b7, (1, 4)
    acc8 = p_ref[_R8 + IN_F:_R8 + IN_F + 1, 0:OUT_F]  # b8, (1, 4)
    for k in range(IN_F):
        v1k = v1[:, k:k + 1]                          # (TB, 1)
        acc4 = acc4 + v1k * p_ref[_R7 + k:_R7 + k + 1, 0:OUT_F]
        acc8 = acc8 + v1k * p_ref[_R8 + k:_R8 + k + 1, 0:OUT_F]

    # log(pow(v4, v8)) fused to v8 * log(v4): one EUP transcendental.
    # TODO(synk): torch.nn.functional.log does not exist in PyTorch; interpreted
    # as elementwise natural log. The fused form diverges from log(pow(v4, v8))
    # only for v4 < 0 with exactly-integer v8, and for v4 == 0, v8 == 0 (both
    # measure-zero for float inputs).
    o_ref[...] = acc8 * jnp.log(acc4)                 # (TB, 4)


def _pick_tile_b(batch):
    """Largest convenient batch tile that divides B; fall back to one full block."""
    for t in (512, 256, 128, 64, 32, 16, 8):
        if batch % t == 0:
            return t
    return batch


def model_forward(x, packed_params):
    """x: (B, 4) f32 row-major; packed_params: (16, 128) f32 packed as documented."""
    batch = x.shape[0]
    tb = _pick_tile_b(batch)
    grid = (batch // tb,)
    return pl.pallas_call(
        _mlp_kernel,
        out_shape=jax.ShapeDtypeStruct((batch, OUT_F), jnp.float32),
        grid=grid,
        in_specs=[
            pl.BlockSpec((tb, IN_F), lambda i: (i, 0)),          # batch blocks of x
            pl.BlockSpec((P_ROWS, P_LANES), lambda i: (0, 0)),   # params, same block
        ],
        out_specs=pl.BlockSpec((tb, OUT_F), lambda i: (i, 0)),
        compiler_params=pltpu.CompilerParams(
            dimension_semantics=("parallel",)),                   # 2x on v7x megacore
    )(x, packed_params)


def init_packed_params(key):
    """Deterministic init mimicking torch.nn.Linear default (+/- 1/sqrt(in))."""
    ks = jax.random.split(key, 6)
    bound = 1.0 / jnp.sqrt(jnp.float32(IN_F))
    u = lambda k, shape: jax.random.uniform(
        k, shape, dtype=jnp.float32, minval=-bound, maxval=bound)
    # torch convention: weight is (out, in); y = x @ W.T + b
    w0, b0 = u(ks[0], (OUT_F, IN_F)), u(ks[1], (OUT_F,))
    w7, b7 = u(ks[2], (OUT_F, IN_F)), u(ks[3], (OUT_F,))
    w8, b8 = u(ks[4], (OUT_F, IN_F)), u(ks[5], (OUT_F,))

    p = jnp.zeros((P_ROWS, P_LANES), jnp.float32)
    p = p.at[0:IN_F, 0:OUT_F].set(w0.T)
    p = p.at[IN_F, 0:OUT_F].set(b0)
    p = p.at[_R7:_R7 + IN_F, 0:OUT_F].set(w7.T)
    p = p.at[_R7 + IN_F, 0:OUT_F].set(b7)
    p = p.at[_R8:_R8 + IN_F, 0:OUT_F].set(w8.T)
    p = p.at[_R8 + IN_F, 0:OUT_F].set(b8)
    return p, (w0, b0, w7, b7, w8, b8)


def reference_forward(x, raw_params):
    """Plain-JAX reference of the torch graph: log(pow(v4, v8)) (un-fused tail)."""
    w0, b0, w7, b7, w8, b8 = raw_params
    v1 = jnp.maximum(x @ w0.T + b0, 0.0)
    v4 = v1 @ w7.T + b7
    v8 = v1 @ w8.T + b8
    return jnp.log(jnp.power(v4, v8))


if __name__ == "__main__":
    key = jax.random.PRNGKey(0)
    k_x, k_xb, k_p = jax.random.split(key, 3)
    packed, raw = init_packed_params(k_p)

    # Matches the torch spec: x = torch.randn(1, 4)
    x = jax.random.normal(k_x, (1, IN_F), dtype=jnp.float32)
    out = jax.block_until_ready(model_forward(x, packed))
    ref = reference_forward(x, raw)
    assert out.shape == (1, OUT_F) and out.dtype == jnp.float32
    # NaN / -inf outputs are expected when v4 <= 0 (same positions in both).
    assert bool(jnp.allclose(out, ref, rtol=1e-5, atol=1e-5, equal_nan=True)), (out, ref)

    # Small batched run to exercise the batched / grid path as well.
    xb = jax.random.normal(k_xb, (8, IN_F), dtype=jnp.float32)
    outb = jax.block_until_ready(model_forward(xb, packed))
    refb = reference_forward(xb, raw)
    assert outb.shape == (8, OUT_F)
    assert bool(jnp.allclose(outb, refb, rtol=1e-5, atol=1e-5, equal_nan=True)), (outb, refb)

    print("KERNEL_OK")
</pallas_src>

<mosaic_0001>
module attributes {stable_mosaic.version = 11 : i64} {
  func.func @_mlp_kernel(%arg0: i32, %arg1: memref<1x4xf32, #tpu.memory_space<vmem>>, %arg2: memref<16x128xf32, #tpu.memory_space<vmem>>, %arg3: memref<1x4xf32, #tpu.memory_space<vmem>>) attributes {dimension_semantics = [#tpu.dimension_semantics<parallel>], iteration_bounds = array<i64: 1>, scalar_prefetch = 0 : i64, scratch_operands = 0 : i64, tpu.core_type = #tpu.core_type<tc>, window_params = [{transform_indices = @transform_0, window_bounds = array<i64: 1, 4>}, {pipeline_mode = #tpu.pipeline_mode<synchronous>, transform_indices = @transform_1, window_bounds = array<i64: 16, 128>}, {transform_indices = @transform_2, window_bounds = array<i64: 1, 4>}]} {
    %c0 = arith.constant 0 : index
    %c0_0 = arith.constant 0 : index
    %0 = vector.load %arg1[%c0, %c0_0] : memref<1x4xf32, #tpu.memory_space<vmem>>, vector<1x4xf32>
    %c4 = arith.constant 4 : index
    %c0_1 = arith.constant 0 : index
    %1 = vector.load %arg2[%c4, %c0_1] : memref<16x128xf32, #tpu.memory_space<vmem>>, vector<1x4xf32>
    %2 = vector.extract_strided_slice %0 {offsets = [0, 0], sizes = [1, 1], strides = [1, 1]} : vector<1x4xf32> to vector<1x1xf32>
    %c0_2 = arith.constant 0 : index
    %c0_3 = arith.constant 0 : index
    %3 = vector.load %arg2[%c0_2, %c0_3] : memref<16x128xf32, #tpu.memory_space<vmem>>, vector<1x4xf32>
    %4 = vector.broadcast %2 : vector<1x1xf32> to vector<1x4xf32>
    %5 = arith.mulf %4, %3 : vector<1x4xf32>
    %6 = arith.addf %1, %5 : vector<1x4xf32>
    %7 = vector.extract_strided_slice %0 {offsets = [0, 1], sizes = [1, 1], strides = [1, 1]} : vector<1x4xf32> to vector<1x1xf32>
    %c1 = arith.constant 1 : index
    %c0_4 = arith.constant 0 : index
    %8 = vector.load %arg2[%c1, %c0_4] : memref<16x128xf32, #tpu.memory_space<vmem>>, vector<1x4xf32>
    %9 = vector.broadcast %7 : vector<1x1xf32> to vector<1x4xf32>
    %10 = arith.mulf %9, %8 : vector<1x4xf32>
    %11 = arith.addf %6, %10 : vector<1x4xf32>
    %12 = vector.extract_strided_slice %0 {offsets = [0, 2], sizes = [1, 1], strides = [1, 1]} : vector<1x4xf32> to vector<1x1xf32>
    %c2 = arith.constant 2 : index
    %c0_5 = arith.constant 0 : index
    %13 = vector.load %arg2[%c2, %c0_5] : memref<16x128xf32, #tpu.memory_space<vmem>>, vector<1x4xf32>
    %14 = vector.broadcast %12 : vector<1x1xf32> to vector<1x4xf32>
    %15 = arith.mulf %14, %13 : vector<1x4xf32>
    %16 = arith.addf %11, %15 : vector<1x4xf32>
    %17 = vector.extract_strided_slice %0 {offsets = [0, 3], sizes = [1, 1], strides = [1, 1]} : vector<1x4xf32> to vector<1x1xf32>
    %c3 = arith.constant 3 : index
    %c0_6 = arith.constant 0 : index
    %18 = vector.load %arg2[%c3, %c0_6] : memref<16x128xf32, #tpu.memory_space<vmem>>, vector<1x4xf32>
    %19 = vector.broadcast %17 : vector<1x1xf32> to vector<1x4xf32>
    %20 = arith.mulf %19, %18 : vector<1x4xf32>
    %21 = arith.addf %16, %20 : vector<1x4xf32>
    %cst = arith.constant 0.000000e+00 : f32
    %22 = vector.broadcast %cst : f32 to vector<1x4xf32>
    %23 = arith.maximumf %21, %22 : vector<1x4xf32>
    %c9 = arith.constant 9 : index
    %c0_7 = arith.constant 0 : index
    %24 = vector.load %arg2[%c9, %c0_7] : memref<16x128xf32, #tpu.memory_space<vmem>>, vector<1x4xf32>
    %c14 = arith.constant 14 : index
    %c0_8 = arith.constant 0 : index
    %25 = vector.load %arg2[%c14, %c0_8] : memref<16x128xf32, #tpu.memory_space<vmem>>, vector<1x4xf32>
    %26 = vector.extract_strided_slice %23 {offsets = [0, 0], sizes = [1, 1], strides = [1, 1]} : vector<1x4xf32> to vector<1x1xf32>
    %c5 = arith.constant 5 : index
    %c0_9 = arith.constant 0 : index
    %27 = vector.load %arg2[%c5, %c0_9] : memref<16x128xf32, #tpu.memory_space<vmem>>, vector<1x4xf32>
    %28 = vector.broadcast %26 : vector<1x1xf32> to vector<1x4xf32>
    %29 = arith.mulf %28, %27 : vector<1x4xf32>
    %30 = arith.addf %24, %29 : vector<1x4xf32>
    %c10 = arith.constant 10 : index
    %c0_10 = arith.constant 0 : index
    %31 = vector.load %arg2[%c10, %c0_10] : memref<16x128xf32, #tpu.memory_space<vmem>>, vector<1x4xf32>
    %32 = vector.broadcast %26 : vector<1x1xf32> to vector<1x4xf32>
    %33 = arith.mulf %32, %31 : vector<1x4xf32>
    %34 = arith.addf %25, %33 : vector<1x4xf32>
    %35 = vector.extract_strided_slice %23 {offsets = [0, 1], sizes = [1, 1], strides = [1, 1]} : vector<1x4xf32> to vector<1x1xf32>
    %c6 = arith.constant 6 : index
    %c0_11 = arith.constant 0 : index
    %36 = vector.load %arg2[%c6, %c0_11] : memref<16x128xf32, #tpu.memory_space<vmem>>, vector<1x4xf32>
    %37 = vector.broadcast %35 : vector<1x1xf32> to vector<1x4xf32>
    %38 = arith.mulf %37, %36 : vector<1x4xf32>
    %39 = arith.addf %30, %38 : vector<1x4xf32>
    %c11 = arith.constant 11 : index
    %c0_12 = arith.constant 0 : index
    %40 = vector.load %arg2[%c11, %c0_12] : memref<16x128xf32, #tpu.memory_space<vmem>>, vector<1x4xf32>
    %41 = vector.broadcast %35 : vector<1x1xf32> to vector<1x4xf32>
    %42 = arith.mulf %41, %40 : vector<1x4xf32>
    %43 = arith.addf %34, %42 : vector<1x4xf32>
    %44 = vector.extract_strided_slice %23 {offsets = [0, 2], sizes = [1, 1], strides = [1, 1]} : vector<1x4xf32> to vector<1x1xf32>
    %c7 = arith.constant 7 : index
    %c0_13 = arith.constant 0 : index
    %45 = vector.load %arg2[%c7, %c0_13] : memref<16x128xf32, #tpu.memory_space<vmem>>, vector<1x4xf32>
    %46 = vector.broadcast %44 : vector<1x1xf32> to vector<1x4xf32>
    %47 = arith.mulf %46, %45 : vector<1x4xf32>
    %48 = arith.addf %39, %47 : vector<1x4xf32>
    %c12 = arith.constant 12 : index
    %c0_14 = arith.constant 0 : index
    %49 = vector.load %arg2[%c12, %c0_14] : memref<16x128xf32, #tpu.memory_space<vmem>>, vector<1x4xf32>
    %50 = vector.broadcast %44 : vector<1x1xf32> to vector<1x4xf32>
    %51 = arith.mulf %50, %49 : vector<1x4xf32>
    %52 = arith.addf %43, %51 : vector<1x4xf32>
    %53 = vector.extract_strided_slice %23 {offsets = [0, 3], sizes = [1, 1], strides = [1, 1]} : vector<1x4xf32> to vector<1x1xf32>
    %c8 = arith.constant 8 : index
    %c0_15 = arith.constant 0 : index
    %54 = vector.load %arg2[%c8, %c0_15] : memref<16x128xf32, #tpu.memory_space<vmem>>, vector<1x4xf32>
    %55 = vector.broadcast %53 : vector<1x1xf32> to vector<1x4xf32>
    %56 = arith.mulf %55, %54 : vector<1x4xf32>
    %57 = arith.addf %48, %56 : vector<1x4xf32>
    %c13 = arith.constant 13 : index
    %c0_16 = arith.constant 0 : index
    %58 = vector.load %arg2[%c13, %c0_16] : memref<16x128xf32, #tpu.memory_space<vmem>>, vector<1x4xf32>
    %59 = vector.broadcast %53 : vector<1x1xf32> to vector<1x4xf32>
    %60 = arith.mulf %59, %58 : vector<1x4xf32>
    %61 = arith.addf %52, %60 : vector<1x4xf32>
    %62 = math.log %57 : vector<1x4xf32>
    %63 = arith.mulf %61, %62 : vector<1x4xf32>
    %c0_17 = arith.constant 0 : index
    %c0_18 = arith.constant 0 : index
    %64 = vector.load %arg3[%c0_17, %c0_18] : memref<1x4xf32, #tpu.memory_space<vmem>>, vector<1x4xf32>
    tpu.vector_store %arg3[%c0_17, %c0_18], %63 {strides = array<i32>} : memref<1x4xf32, #tpu.memory_space<vmem>>, vector<1x4xf32>,
    return
  }
  func.func @transform_0(%arg0: i32) -> (i32, i32) {
    %c0_i32 = arith.constant 0 : i32
    %c0_i32_0 = arith.constant 0 : i32
    return %arg0, %c0_i32 : i32, i32
  }
  func.func @transform_1(%arg0: i32) -> (i32, i32) {
    %c0_i32 = arith.constant 0 : i32
    %c0_i32_0 = arith.constant 0 : i32
    %c0_i32_1 = arith.constant 0 : i32
    return %c0_i32, %c0_i32_0 : i32, i32
  }
  func.func @transform_2(%arg0: i32) -> (i32, i32) {
    %c0_i32 = arith.constant 0 : i32
    %c0_i32_0 = arith.constant 0 : i32
    return %arg0, %c0_i32 : i32, i32
  }
}

</mosaic_0001>

<llo_original>
// kernel: tpu_custom_call.1
$region0: #{tpu_custom_call.1}
  #allocation0 [shape = 'u32[]', space=smem, size = 0x4, offset = 0x4, fixed_abs, tag = 'smem constant byte address 0x4 - core index']
  #allocation1 [shape = 'u32[144,128]{1,0:T(1,128)}', space=vmem, size = 0x12000, scoped, tag = 'internal scratch']
  %s0 = inlined_call_operand.hbm [shape: f32[1,4], index: 0, kind: input, shape index: {}]
  %s1 = inlined_call_operand.hbm [shape: f32[16,128], index: 1, kind: input, shape index: {}]
  %s2 = inlined_call_operand.hbm [shape: f32[1,4], index: 2, kind: output, shape index: {}]
  %s3 = sld [smem:[#allocation0]]
  $region26: #{tpu_custom_call.1} parent=0
    _
  %s5 = ssub.s32 1, %s3
  %s6 = scalar_select 0, %s5, %s3
  $region1: #{tpu_custom_call.1} parent=0
    #allocation2 [shape = 'u8[512]{0}', space=vmem, size = 0x400, scoped, tag = 'input window, operand 0, single buffered']
    #allocation3 [shape = 's32[1]{0}', space=sflag, size = 0x4, scoped, tag = 'scoped memory for tpu_custom_call.1']
    #allocation4 [shape = 's32[1]{0}', space=sflag, size = 0x4, scoped, tag = 'scoped memory for tpu_custom_call.1']
    #allocation5 [shape = 'u8[8192]{0}', space=vmem, size = 0x2000, scoped, tag = 'input window, operand 1, single buffered']
    #allocation6 [shape = 's32[1]{0}', space=sflag, size = 0x4, scoped, tag = 'scoped memory for tpu_custom_call.1']
    #allocation7 [shape = 'u8[512]{0}', space=vmem, size = 0x400, scoped, tag = 'output window, operand 0, single buffered']
    %7 = vsyncpa [#allocation3], 0
    %8 = vsyncpa [#allocation6], 0
    %9 = vsyncpa [#allocation4], 0
    // Predicated region
    $region2: #{tpu_custom_call.1} parent=1 // pred_check
      _
    $region3: #{tpu_custom_call.1} parent=1 // pred_check_branch
      %11 = sbr.rel (0) target = $region5
    $region4: #{tpu_custom_call.1} parent=1 // pred_region
      %s13 = ssub.s32 16, 16
      %14 = vsyncadd [#allocation3], %s13
      %s16 = sshll.u32 [#allocation2], 4
      %s17 = int_to_ptr.vmem [resolvable:$true] %s16
      %19 = dma.hbm_to_vmem [thread:$0]  %s0, 16, %s17, [#allocation3]
    $region5: #{tpu_custom_call.1} parent=1 // pred_fallthru
      _
    // Predicated region
    $region6: #{tpu_custom_call.1} parent=1 // pred_check
      _
    $region7: #{tpu_custom_call.1} parent=1 // pred_check_branch
      %21 = sbr.rel (0) target = $region9
    $region8: #{tpu_custom_call.1} parent=1 // pred_region
      %s23 = ssub.s32 256, 256
      %24 = vsyncadd [#allocation6], %s23
      %s25 = sshll.u32 [#allocation5], 4
      %s26 = int_to_ptr.vmem [resolvable:$true] %s25
      %31 = dma.hbm_to_vmem [thread:$0]  %s1, 256, %s26, [#allocation6], 128, 128, 8
    $region9: #{tpu_custom_call.1} parent=1 // pred_fallthru
      _
    // Predicated region
    $region10: #{tpu_custom_call.1} parent=1 // pred_check
      _
    $region11: #{tpu_custom_call.1} parent=1 // pred_check_branch
      %33 = sbr.rel (0) target = $region13
    $region12: #{tpu_custom_call.1} parent=1 // pred_region
      %34 = dma.done [#allocation3], 16
    $region13: #{tpu_custom_call.1} parent=1 // pred_fallthru
      _
    // Predicated region
    $region14: #{tpu_custom_call.1} parent=1 // pred_check
      _
    $region15: #{tpu_custom_call.1} parent=1 // pred_check_branch
      %36 = sbr.rel (0) target = $region17
    $region16: #{tpu_custom_call.1} parent=1 // pred_region
      %37 = dma.done [#allocation6], 256
    $region17: #{tpu_custom_call.1} parent=1 // pred_fallthru
      _
    %v38 = vld [vmem:[#allocation2] sm:$0x1]
    %v39 = vld [vmem:[#allocation5 + $0x4] sm:$0x1]
    %v40 = vld [vmem:[#allocation5] sm:$0x1]
    %42 = vset.pattern.permute.xlu0 0
    %43 = vperm.xlu0 %42, %v38
    %v44 = vpop.permute.xlu0 %43
    %v46 = vlaneseq
    %v47 = vshrl.u32 %v46, 7
    %v48 = vsub.s32 0, %v47
    %v49 = vrot.slane %v44, %v48
    %v50 = vmul.f32 %v49, %v40
    %v51 = vadd.f32 %v39, %v50
    %v52 = vld [vmem:[#allocation5 + $0x1] sm:$0x1]
    %53 = vset.pattern.permute.xlu0 1
    %54 = vperm.xlu0 %53, %v38
    %v55 = vpop.permute.xlu0 %54
    %v57 = vlaneseq
    %v58 = vshrl.u32 %v57, 7
    %v59 = vsub.s32 0, %v58
    %v60 = vrot.slane %v55, %v59
    %v61 = vmul.f32 %v60, %v52
    %v62 = vadd.f32 %v51, %v61
    %v63 = vld [vmem:[#allocation5 + $0x2] sm:$0x1]
    %64 = vset.pattern.permute.xlu0 2
    %65 = vperm.xlu0 %64, %v38
    %v66 = vpop.permute.xlu0 %65
    %v68 = vlaneseq
    %v69 = vshrl.u32 %v68, 7
    %v70 = vsub.s32 0, %v69
    %v71 = vrot.slane %v66, %v70
    %v72 = vmul.f32 %v71, %v63
    %v73 = vadd.f32 %v62, %v72
    %v74 = vld [vmem:[#allocation5 + $0x3] sm:$0x1]
    %75 = vset.pattern.permute.xlu0 3
    %76 = vperm.xlu0 %75, %v38
    %v77 = vpop.permute.xlu0 %76
    %v79 = vlaneseq
    %v80 = vshrl.u32 %v79, 7
    %v81 = vsub.s32 0, %v80
    %v82 = vrot.slane %v77, %v81
    %v83 = vmul.f32 %v82, %v74
    %v84 = vadd.f32 %v73, %v83
    %v85 = vmax.f32 %v84, 0.0
    %v86 = vld [vmem:[#allocation5 + $0x9] sm:$0x1]
    %v87 = vld [vmem:[#allocation5 + $0xe] sm:$0x1]
    %v88 = vld [vmem:[#allocation5 + $0x5] sm:$0x1]
    %90 = vset.pattern.permute.xlu0 0
    %91 = vperm.xlu0 %90, %v85
    %v92 = vpop.permute.xlu0 %91
    %v94 = vmul.f32 %v92, %v88
    %v95 = vadd.f32 %v86, %v94
    %v96 = vld [vmem:[#allocation5 + $0xa] sm:$0x1]
    %v97 = vmul.f32 %v92, %v96
    %v98 = vadd.f32 %v87, %v97
    %v99 = vld [vmem:[#allocation5 + $0x6] sm:$0x1]
    %100 = vset.pattern.permute.xlu0 1
    %101 = vperm.xlu0 %100, %v85
    %v102 = vpop.permute.xlu0 %101
    %v104 = vmul.f32 %v102, %v99
    %v105 = vadd.f32 %v95, %v104
    %v106 = vld [vmem:[#allocation5 + $0xb] sm:$0x1]
    %v107 = vmul.f32 %v102, %v106
    %v108 = vadd.f32 %v98, %v107
    %v109 = vld [vmem:[#allocation5 + $0x7] sm:$0x1]
    %110 = vset.pattern.permute.xlu0 2
    %111 = vperm.xlu0 %110, %v85
    %v112 = vpop.permute.xlu0 %111
    %v114 = vmul.f32 %v112, %v109
    %v115 = vadd.f32 %v105, %v114
    %v116 = vld [vmem:[#allocation5 + $0xc] sm:$0x1]
    %v117 = vmul.f32 %v112, %v116
    %v118 = vadd.f32 %v108, %v117
    %v119 = vld [vmem:[#allocation5 + $0x8] sm:$0x1]
    %120 = vset.pattern.permute.xlu0 3
    %121 = vperm.xlu0 %120, %v85
    %v122 = vpop.permute.xlu0 %121
    %v124 = vmul.f32 %v122, %v119
    %v125 = vadd.f32 %v115, %v124
    %v126 = vld [vmem:[#allocation5 + $0xd] sm:$0x1]
    %v127 = vmul.f32 %v122, %v126
    %v128 = vadd.f32 %v118, %v127
    %v129 = vlog2.pop %v125
    %v130 = vmul.f32 %v129, 0.6931472
    %v131 = vmul.f32 %v128, %v130
    %vm132 = vcmask 24576
    %133 = vst.msk [vmem:[#allocation7] sm:$0x1] %vm132, %v131
    // Predicated region
    $region18: #{tpu_custom_call.1} parent=1 // pred_check
      _
    $region19: #{tpu_custom_call.1} parent=1 // pred_check_branch
      %135 = sbr.rel (0) target = $region21
    $region20: #{tpu_custom_call.1} parent=1 // pred_region
      %s137 = ssub.s32 16, 16
      %138 = vsyncadd [#allocation4], %s137
      %s140 = sshll.u32 [#allocation7], 4
      %s141 = int_to_ptr.vmem [resolvable:$true] %s140
      %143 = dma.vmem_to_hbm [thread:$0]  %s141, 16, %s2, [#allocation4]
    $region21: #{tpu_custom_call.1} parent=1 // pred_fallthru
      _
    // Predicated region
    $region22: #{tpu_custom_call.1} parent=1 // pred_check
      _
    $region23: #{tpu_custom_call.1} parent=1 // pred_check_branch
      %145 = sbr.rel (0) target = $region25
    $region24: #{tpu_custom_call.1} parent=1 // pred_region
      %146 = dma.done [#allocation4], 16
    $region25: #{tpu_custom_call.1} parent=1 // pred_fallthru
      _
    %147 = vsyncpa [#allocation3], 1
    %148 = vsyncpa [#allocation6], 1
    %149 = vsyncpa [#allocation4], 1

</llo_original>
